<compile_context>
chip_gen: v7x
topology: tpu7x:2x2x1
jax: 0.10.0
libtpu: 0.0.40
codegen_flags: <defaults>
</compile_context>

<pallas_src>
import functools

import jax
import jax.numpy as jnp
from jax.experimental import pallas as pl
from jax.experimental.pallas import tpu as pltpu


def policy_fwd_kernel(xt_ref, w1t_ref, b1_ref, w2t_ref, b2_ref, out_ref):
    # xt_ref:  [n_in, TB]        one batch tile, batch on the lane axis
    # w1t_ref: [n_hidden, n_in]  fc1 weight (PyTorch [out, in] layout)
    # b1_ref:  [n_hidden, 1]
    # w2t_ref: [n_out, n_hidden] fc2 weight (PyTorch [out, in] layout)
    # b2_ref:  [n_out, 1]
    # out_ref: [n_out, TB]       probabilities, batch on the lane axis
    xt = xt_ref[...]

    # fc1 + ReLU:  h^T = relu(W1 @ x^T + b1)
    h = jnp.maximum(
        jnp.dot(w1t_ref[...], xt, preferred_element_type=jnp.float32)
        + b1_ref[...],
        0.0,
    )

    # fc2:  logits^T = W2 @ h^T + b2
    logits = (
        jnp.dot(w2t_ref[...], h, preferred_element_type=jnp.float32)
        + b2_ref[...]
    )

    n_out = out_ref.shape[0]
    if n_out == 2:
        # 2-class softmax == sigmoid of the logit difference.  p0 = 1 - p1
        # keeps every column summing to exactly 1.0; the exp lands on the EUP
        # slot and no reductions are needed.
        p1 = 1.0 / (1.0 + jnp.exp(logits[0:1, :] - logits[1:2, :]))
        out_ref[0:1, :] = 1.0 - p1
        out_ref[1:2, :] = p1
    else:
        # General numerically-stable softmax over the class (sublane) axis,
        # with an exact division so columns sum to 1 to machine precision.
        m = jnp.max(logits, axis=0, keepdims=True)
        e = jnp.exp(logits - m)
        out_ref[...] = e / jnp.sum(e, axis=0, keepdims=True)


@functools.partial(jax.jit, static_argnums=(5,))
def _policy_forward_impl(x, w1, b1, w2, b2, block_b):
    B, n_in = x.shape
    n_hidden = w1.shape[1]
    n_out = w2.shape[1]

    # Batch-on-lanes layout (lane-dense input and output blocks).
    xt = x.T.astype(jnp.float32)                       # [n_in, B]
    w1t = w1.T.astype(jnp.float32)                     # [n_hidden, n_in]
    w2t = w2.T.astype(jnp.float32)                     # [n_out, n_hidden]
    b1c = b1.reshape(n_hidden, 1).astype(jnp.float32)  # [n_hidden, 1]
    b2c = b2.reshape(n_out, 1).astype(jnp.float32)     # [n_out, 1]

    if B <= block_b:
        # Single grid step; blocks == full arrays, so no (8,128) tiling
        # constraint and no padding/dead work at all.
        tb = B
    else:
        # Lane-axis tile: must be a multiple of 128.
        tb = max(128, (block_b // 128) * 128)
    grid = (pl.cdiv(B, tb),)

    out_t = pl.pallas_call(
        policy_fwd_kernel,
        out_shape=jax.ShapeDtypeStruct((n_out, B), jnp.float32),
        grid=grid,
        in_specs=[
            # x^T batch tile, marches with the grid index.
            pl.BlockSpec((n_in, tb), lambda i: (0, i)),
            # Weights/biases: constant block index -> resident in VMEM.
            pl.BlockSpec((n_hidden, n_in), lambda i: (0, 0)),
            pl.BlockSpec((n_hidden, 1), lambda i: (0, 0)),
            pl.BlockSpec((n_out, n_hidden), lambda i: (0, 0)),
            pl.BlockSpec((n_out, 1), lambda i: (0, 0)),
        ],
        out_specs=pl.BlockSpec((n_out, tb), lambda i: (0, i)),
        compiler_params=pltpu.CompilerParams(
            # Batch tiles are independent -> shardable across TCs on v7x.
            dimension_semantics=("parallel",),
        ),
    )(xt, w1t, b1c, w2t, b2c)

    return out_t.T  # [B, n_out]


def policy_forward(x, w1, b1, w2, b2, *, block_b=4096):
    """x: [B, n_in]; w1: [n_in, n_hidden]; b1: [n_hidden];
    w2: [n_hidden, n_out]; b2: [n_out]  ->  probs [B, n_out] (f32),
    matching softmax(relu(x @ w1 + b1) @ w2 + b2, axis=1)."""
    return _policy_forward_impl(x, w1, b1, w2, b2, int(block_b))


def _reference(x, w1, b1, w2, b2):
    h = jnp.maximum(x @ w1 + b1, 0.0)
    logits = h @ w2 + b2
    return jax.nn.softmax(logits, axis=1)


if __name__ == "__main__":
    # CartPole-ish sizes: n_input=4 (observation dim), n_hidden=32, n_output=2
    n_in, n_hidden, n_out = 4, 32, 2

    key = jax.random.PRNGKey(0)
    kx, k1, k2, k3, k4, kx2 = jax.random.split(key, 6)

    # Deterministic parameters (stored as [in, out]; kernel uses [out, in]).
    w1 = jax.random.normal(k1, (n_in, n_hidden), dtype=jnp.float32) * 0.1
    b1 = jax.random.normal(k2, (n_hidden,), dtype=jnp.float32) * 0.1
    w2 = jax.random.normal(k3, (n_hidden, n_out), dtype=jnp.float32) * 0.1
    b2 = jax.random.normal(k4, (n_out,), dtype=jnp.float32) * 0.1

    # --- small-batch case (the module's single-env `action` path) ---
    B = 2
    x = jax.random.normal(kx, (B, n_in), dtype=jnp.float32)
    probs = jax.block_until_ready(policy_forward(x, w1, b1, w2, b2))
    ref = _reference(x, w1, b1, w2, b2)
    assert probs.shape == (B, n_out)
    assert jnp.allclose(probs, ref, atol=1e-3, rtol=1e-3)
    assert jnp.allclose(jnp.sum(probs, axis=1), 1.0, atol=1e-4)

    # --- batched case, small tile: multi-step grid with a clipped partial
    #     last block (300 = 2*128 + 44), no wrapper-side padding ---
    B2 = 300
    x2 = jax.random.normal(kx2, (B2, n_in), dtype=jnp.float32)
    probs2 = jax.block_until_ready(
        policy_forward(x2, w1, b1, w2, b2, block_b=128))
    ref2 = _reference(x2, w1, b1, w2, b2)
    assert probs2.shape == (B2, n_out)
    assert jnp.allclose(probs2, ref2, atol=1e-3, rtol=1e-3)
    assert jnp.allclose(jnp.sum(probs2, axis=1), 1.0, atol=1e-4)

    # --- same batch through the default large-tile single-step path ---
    probs3 = jax.block_until_ready(policy_forward(x2, w1, b1, w2, b2))
    assert jnp.allclose(probs3, ref2, atol=1e-3, rtol=1e-3)
    assert jnp.allclose(jnp.sum(probs3, axis=1), 1.0, atol=1e-4)

    print("KERNEL_OK")
</pallas_src>

<mosaic_0001>
module attributes {stable_mosaic.version = 11 : i64} {
  func.func @policy_fwd_kernel(%arg0: i32, %arg1: memref<4x2xf32, #tpu.memory_space<vmem>>, %arg2: memref<32x4xf32, #tpu.memory_space<vmem>>, %arg3: memref<32x1xf32, #tpu.memory_space<vmem>>, %arg4: memref<2x32xf32, #tpu.memory_space<vmem>>, %arg5: memref<2x1xf32, #tpu.memory_space<vmem>>, %arg6: memref<2x2xf32, #tpu.memory_space<vmem>>) attributes {dimension_semantics = [#tpu.dimension_semantics<parallel>], iteration_bounds = array<i64: 1>, scalar_prefetch = 0 : i64, scratch_operands = 0 : i64, tpu.core_type = #tpu.core_type<tc>, window_params = [{transform_indices = @transform_0, window_bounds = array<i64: 4, 2>}, {pipeline_mode = #tpu.pipeline_mode<synchronous>, transform_indices = @transform_1, window_bounds = array<i64: 32, 4>}, {pipeline_mode = #tpu.pipeline_mode<synchronous>, transform_indices = @transform_2, window_bounds = array<i64: 32, 1>}, {pipeline_mode = #tpu.pipeline_mode<synchronous>, transform_indices = @transform_3, window_bounds = array<i64: 2, 32>}, {pipeline_mode = #tpu.pipeline_mode<synchronous>, transform_indices = @transform_4, window_bounds = array<i64: 2, 1>}, {transform_indices = @transform_5, window_bounds = array<i64: 2, 2>}]} {
    %c0 = arith.constant 0 : index
    %c0_0 = arith.constant 0 : index
    %0 = vector.load %arg1[%c0, %c0_0] : memref<4x2xf32, #tpu.memory_space<vmem>>, vector<4x2xf32>
    %c0_1 = arith.constant 0 : index
    %c0_2 = arith.constant 0 : index
    %1 = vector.load %arg2[%c0_1, %c0_2] : memref<32x4xf32, #tpu.memory_space<vmem>>, vector<32x4xf32>
    %cst = arith.constant dense<0.000000e+00> : vector<32x2xf32>
    %2 = tpu.matmul %1, %0, %cst {dimension_numbers = #tpu.dot_dimension_numbers<[1], [0], [0], [1], [0, 0, 1, 1], [], []>} : vector<32x4xf32>, vector<4x2xf32>, vector<32x2xf32> -> vector<32x2xf32>
    %c0_3 = arith.constant 0 : index
    %c0_4 = arith.constant 0 : index
    %3 = vector.load %arg3[%c0_3, %c0_4] : memref<32x1xf32, #tpu.memory_space<vmem>>, vector<32x1xf32>
    %4 = vector.broadcast %3 : vector<32x1xf32> to vector<32x2xf32>
    %5 = arith.addf %2, %4 : vector<32x2xf32>
    %cst_5 = arith.constant 0.000000e+00 : f32
    %6 = vector.broadcast %cst_5 : f32 to vector<32x2xf32>
    %7 = arith.maximumf %5, %6 : vector<32x2xf32>
    %c0_6 = arith.constant 0 : index
    %c0_7 = arith.constant 0 : index
    %8 = vector.load %arg4[%c0_6, %c0_7] : memref<2x32xf32, #tpu.memory_space<vmem>>, vector<2x32xf32>
    %cst_8 = arith.constant dense<0.000000e+00> : vector<2x2xf32>
    %9 = tpu.matmul %8, %7, %cst_8 {dimension_numbers = #tpu.dot_dimension_numbers<[1], [0], [0], [1], [0, 0, 1, 1], [], []>} : vector<2x32xf32>, vector<32x2xf32>, vector<2x2xf32> -> vector<2x2xf32>
    %c0_9 = arith.constant 0 : index
    %c0_10 = arith.constant 0 : index
    %10 = vector.load %arg5[%c0_9, %c0_10] : memref<2x1xf32, #tpu.memory_space<vmem>>, vector<2x1xf32>
    %11 = vector.broadcast %10 : vector<2x1xf32> to vector<2x2xf32>
    %12 = arith.addf %9, %11 : vector<2x2xf32>
    %13 = vector.extract_strided_slice %12 {offsets = [0, 0], sizes = [1, 2], strides = [1, 1]} : vector<2x2xf32> to vector<1x2xf32>
    %14 = vector.extract_strided_slice %12 {offsets = [1, 0], sizes = [1, 2], strides = [1, 1]} : vector<2x2xf32> to vector<1x2xf32>
    %15 = arith.subf %13, %14 : vector<1x2xf32>
    %16 = math.exp %15 : vector<1x2xf32>
    %cst_11 = arith.constant 1.000000e+00 : f32
    %17 = vector.broadcast %cst_11 : f32 to vector<1x2xf32>
    %18 = arith.addf %17, %16 : vector<1x2xf32>
    %cst_12 = arith.constant 1.000000e+00 : f32
    %19 = vector.broadcast %cst_12 : f32 to vector<1x2xf32>
    %20 = arith.divf %19, %18 : vector<1x2xf32>
    %cst_13 = arith.constant 1.000000e+00 : f32
    %21 = vector.broadcast %cst_13 : f32 to vector<1x2xf32>
    %22 = arith.subf %21, %20 : vector<1x2xf32>
    %c0_14 = arith.constant 0 : index
    %c0_15 = arith.constant 0 : index
    %23 = vector.load %arg6[%c0_14, %c0_15] : memref<2x2xf32, #tpu.memory_space<vmem>>, vector<1x2xf32>
    tpu.vector_store %arg6[%c0_14, %c0_15], %22 {strides = array<i32>} : memref<2x2xf32, #tpu.memory_space<vmem>>, vector<1x2xf32>,
    %c1 = arith.constant 1 : index
    %c0_16 = arith.constant 0 : index
    %24 = vector.load %arg6[%c1, %c0_16] : memref<2x2xf32, #tpu.memory_space<vmem>>, vector<1x2xf32>
    tpu.vector_store %arg6[%c1, %c0_16], %20 {strides = array<i32>} : memref<2x2xf32, #tpu.memory_space<vmem>>, vector<1x2xf32>,
    return
  }
  func.func @transform_0(%arg0: i32) -> (i32, i32) {
    %c0_i32 = arith.constant 0 : i32
    %c0_i32_0 = arith.constant 0 : i32
    return %c0_i32, %arg0 : i32, i32
  }
  func.func @transform_1(%arg0: i32) -> (i32, i32) {
    %c0_i32 = arith.constant 0 : i32
    %c0_i32_0 = arith.constant 0 : i32
    %c0_i32_1 = arith.constant 0 : i32
    return %c0_i32, %c0_i32_0 : i32, i32
  }
  func.func @transform_2(%arg0: i32) -> (i32, i32) {
    %c0_i32 = arith.constant 0 : i32
    %c0_i32_0 = arith.constant 0 : i32
    %c0_i32_1 = arith.constant 0 : i32
    return %c0_i32, %c0_i32_0 : i32, i32
  }
  func.func @transform_3(%arg0: i32) -> (i32, i32) {
    %c0_i32 = arith.constant 0 : i32
    %c0_i32_0 = arith.constant 0 : i32
    %c0_i32_1 = arith.constant 0 : i32
    return %c0_i32, %c0_i32_0 : i32, i32
  }
  func.func @transform_4(%arg0: i32) -> (i32, i32) {
    %c0_i32 = arith.constant 0 : i32
    %c0_i32_0 = arith.constant 0 : i32
    %c0_i32_1 = arith.constant 0 : i32
    return %c0_i32, %c0_i32_0 : i32, i32
  }
  func.func @transform_5(%arg0: i32) -> (i32, i32) {
    %c0_i32 = arith.constant 0 : i32
    %c0_i32_0 = arith.constant 0 : i32
    return %c0_i32, %arg0 : i32, i32
  }
}

</mosaic_0001>

<llo_original>
// kernel: _policy_forward_impl.1
$region0: #{_policy_forward_impl.1}
  #allocation0 [shape = 'u32[]', space=smem, size = 0x4, offset = 0x4, fixed_abs, tag = 'smem constant byte address 0x4 - core index']
  #allocation1 [shape = 'u32[144,128]{1,0:T(1,128)}', space=vmem, size = 0x12000, scoped, tag = 'internal scratch']
  %s0 = inlined_call_operand.vmem [shape: f32[4,2], index: 0, kind: input, shape index: {}]
  %s1 = inlined_call_operand.vmem [shape: f32[32,4], index: 1, kind: input, shape index: {}]
  %s2 = inlined_call_operand.vmem [shape: f32[32,1], index: 2, kind: input, shape index: {}]
  %s3 = inlined_call_operand.vmem [shape: f32[2,32], index: 3, kind: input, shape index: {}]
  %s4 = inlined_call_operand.vmem [shape: f32[2,1], index: 4, kind: input, shape index: {}]
  %s5 = inlined_call_operand.vmem [shape: f32[2,2], index: 5, kind: output, shape index: {}]
  %s6 = sld [smem:[#allocation0]]
  $region30: #{_policy_forward_impl.1} parent=0
    _
  %s8 = ssub.s32 1, %s6
  %s9 = scalar_select 0, %s8, %s6
  // Predicated region
  $region2: #{_policy_forward_impl.1} parent=0 // pred_check
    _
  $region3: #{_policy_forward_impl.1} parent=0 // pred_check_branch
    %11 = sbr.rel (0) target = $region5
  $region4: #{_policy_forward_impl.1} parent=0 // pred_region
    _
  $region5: #{_policy_forward_impl.1} parent=0 // pred_fallthru
    _
  // Predicated region
  $region6: #{_policy_forward_impl.1} parent=0 // pred_check
    _
  $region7: #{_policy_forward_impl.1} parent=0 // pred_check_branch
    %13 = sbr.rel (0) target = $region9
  $region8: #{_policy_forward_impl.1} parent=0 // pred_region
    _
  $region9: #{_policy_forward_impl.1} parent=0 // pred_fallthru
    _
  // Predicated region
  $region10: #{_policy_forward_impl.1} parent=0 // pred_check
    _
  $region11: #{_policy_forward_impl.1} parent=0 // pred_check_branch
    %15 = sbr.rel (0) target = $region13
  $region12: #{_policy_forward_impl.1} parent=0 // pred_region
    _
  $region13: #{_policy_forward_impl.1} parent=0 // pred_fallthru
    _
  // Predicated region
  $region14: #{_policy_forward_impl.1} parent=0 // pred_check
    _
  $region15: #{_policy_forward_impl.1} parent=0 // pred_check_branch
    %17 = sbr.rel (0) target = $region17
  $region16: #{_policy_forward_impl.1} parent=0 // pred_region
    _
  $region17: #{_policy_forward_impl.1} parent=0 // pred_fallthru
    _
  // Predicated region
  $region18: #{_policy_forward_impl.1} parent=0 // pred_check
    _
  $region19: #{_policy_forward_impl.1} parent=0 // pred_check_branch
    %19 = sbr.rel (0) target = $region21
  $region20: #{_policy_forward_impl.1} parent=0 // pred_region
    _
  $region21: #{_policy_forward_impl.1} parent=0 // pred_fallthru
    _
  %v20 = vld [vmem:[%s0] sm:$0xf]
  %v21 = vld [vmem:[%s1] sm:$0xff]
  %v22 = vld [vmem:[%s1 + $0x8] sm:$0xff]
  %v23 = vld [vmem:[%s1 + $0x10] sm:$0xff]
  %v24 = vld [vmem:[%s1 + $0x18] sm:$0xff]
  %v25 = vld [vmem:[%s2] sm:$0xff]
  %v26 = vld [vmem:[%s2 + $0x8] sm:$0xff]
  %v27 = vld [vmem:[%s2 + $0x10] sm:$0xff]
  %v28 = vld [vmem:[%s2 + $0x18] sm:$0xff]
  %30 = vset.pattern.permute.xlu0 0
  %31 = vperm.xlu0 %30, %v25
  %v32 = vpop.permute.xlu0 %31
  %35 = vset.pattern.permute.xlu0 0
  %36 = vperm.xlu0 %35, %v26
  %v37 = vpop.permute.xlu0 %36
  %40 = vset.pattern.permute.xlu0 0
  %41 = vperm.xlu0 %40, %v27
  %v42 = vpop.permute.xlu0 %41
  %45 = vset.pattern.permute.xlu0 0
  %46 = vperm.xlu0 %45, %v28
  %v47 = vpop.permute.xlu0 %46
  %vm49 = vcmask 31744
  %v51 = vsel %vm49, %v21, 0
  %v54 = vsel %vm49, %v22, 0
  %v57 = vsel %vm49, %v23, 0
  %v60 = vsel %vm49, %v24, 0
  %vm62 = vcmask 1043456
  %v64 = vsel %vm62, %v20, 0
  %66 = vmatprep.subr.mxu0 0.0
  %67 = vmatpush1.msra.mxu0 %v64
  %68 = vmatprep.subr.mxu0 0.0
  %69 = vmatpush1.msra.mxu0 0.0
  %70 = vmatprep.subr.mxu0 0.0
  %71 = vmatpush1.msra.mxu0 0.0
  %72 = vmatprep.subr.mxu0 0.0
  %73 = vmatpush1.msra.mxu0 0.0
  %74 = vmatprep.subr.mxu0 0.0
  %75 = vmatpush1.msra.mxu0 0.0
  %76 = vmatprep.subr.mxu0 0.0
  %77 = vmatpush1.msra.mxu0 0.0
  %78 = vmatprep.subr.mxu0 0.0
  %79 = vmatpush1.msra.mxu0 0.0
  %80 = vmatprep.subr.mxu0 0.0
  %81 = vmatpush1.msra.mxu0 0.0
  %82 = vmatprep.subr.mxu0 0.0
  %83 = vmatpush1.msra.mxu0 0.0
  %84 = vmatprep.subr.mxu0 0.0
  %85 = vmatpush1.msra.mxu0 0.0
  %86 = vmatprep.subr.mxu0 0.0
  %87 = vmatpush1.msra.mxu0 0.0
  %88 = vmatprep.subr.mxu0 0.0
  %89 = vmatpush1.msra.mxu0 0.0
  %90 = vmatprep.subr.mxu0 0.0
  %91 = vmatpush1.msra.mxu0 0.0
  %92 = vmatprep.subr.mxu0 0.0
  %93 = vmatpush1.msra.mxu0 0.0
  %94 = vmatprep.subr.mxu0 0.0
  %95 = vmatpush1.msra.mxu0 0.0
  %96 = vmatprep.subr.mxu0 0.0
  %97 = vmatpush1.msra.mxu0 0.0
  %98 = vmatprep.subr.mxu0 0.0
  %99 = vmatpush1.msra.mxu0 0.0
  %100 = vmatprep.subr.mxu0 0.0
  %101 = vmatpush1.msra.mxu0 0.0
  %102 = vmatprep.subr.mxu0 0.0
  %103 = vmatpush1.msra.mxu0 0.0
  %104 = vmatprep.subr.mxu0 0.0
  %105 = vmatpush1.msra.mxu0 0.0
  %106 = vmatprep.subr.mxu0 0.0
  %107 = vmatpush1.msra.mxu0 0.0
  %108 = vmatprep.subr.mxu0 0.0
  %109 = vmatpush1.msra.mxu0 0.0
  %110 = vmatprep.subr.mxu0 0.0
  %111 = vmatpush1.msra.mxu0 0.0
  %112 = vmatprep.subr.mxu0 0.0
  %113 = vmatpush1.msra.mxu0 0.0
  %114 = vmatprep.subr.mxu0 0.0
  %115 = vmatpush1.msra.mxu0 0.0
  %116 = vmatprep.subr.mxu0 0.0
  %117 = vmatpush1.msra.mxu0 0.0
  %118 = vmatprep.subr.mxu0 0.0
  %119 = vmatpush1.msra.mxu0 0.0
  %120 = vmatprep.subr.mxu0 0.0
  %121 = vmatpush1.msra.mxu0 0.0
  %122 = vmatprep.subr.mxu0 0.0
  %123 = vmatpush1.msra.mxu0 0.0
  %124 = vmatprep.subr.mxu0 0.0
  %125 = vmatpush1.msra.mxu0 0.0
  %126 = vmatprep.subr.mxu0 0.0
  %127 = vmatpush1.msra.mxu0 0.0
  %128 = vmatprep.subr.mxu0 0.0
  %129 = vmatpush1.msra.mxu0 0.0
  %130 = vmatprep.mubr.f32.mxu0 0.0
  %131 = vmatmul.mubr.f32.gmra.mrb[0].mxu0 %v51
  %v132 = vpop.f32.mrb[0].mxu0
  %v133 = vadd.f32 %v32, %v132
  %v134 = vpop.f32.mrb[0].mxu0
  %135 = vmatprep.mubr.f32.mxu0 0.0
  %136 = vmatmul.mubr.f32.gmra.mrb[0].mxu0 %v54
  %v137 = vpop.f32.mrb[0].mxu0
  %v138 = vadd.f32 %v37, %v137
  %v139 = vpop.f32.mrb[0].mxu0
  %140 = vmatprep.mubr.f32.mxu0 0.0
  %141 = vmatmul.mubr.f32.gmra.mrb[0].mxu0 %v57
  %v142 = vpop.f32.mrb[0].mxu0
  %v143 = vadd.f32 %v42, %v142
  %v144 = vpop.f32.mrb[0].mxu0
  %145 = vmatprep.mubr.f32.mxu0 0.0
  %146 = vmatmul.mubr.f32.gmra.mrb[0].mxu0 %v60
  %v147 = vpop.f32.mrb[0].mxu0
  %v148 = vadd.f32 %v47, %v147
  %v149 = vpop.f32.mrb[0].mxu0
  %150 = vdwg.mxu0
  %v151 = vmax.f32 %v133, 0.0
  %v152 = vmax.f32 %v138, 0.0
  %v153 = vmax.f32 %v143, 0.0
  %v154 = vmax.f32 %v148, 0.0
  %v155 = vld [vmem:[%s3] sm:$0x3]
  %v156 = vld [vmem:[%s4] sm:$0x3]
  %158 = vset.pattern.permute.xlu0 0
  %159 = vperm.xlu0 %158, %v156
  %v160 = vpop.permute.xlu0 %159
  %vm162 = vcmask 261120
  %v164 = vsel %vm162, %v155, 0
  %166 = vmatprep.subr.mxu0 0.0
  %167 = vmatpush1.msra.mxu0 %v151
  %168 = vmatprep.subr.mxu0 0.0
  %169 = vmatpush1.msra.mxu0 %v152
  %170 = vmatprep.subr.mxu0 0.0
  %171 = vmatpush1.msra.mxu0 %v153
  %172 = vmatprep.subr.mxu0 0.0
  %173 = vmatpush1.msra.mxu0 %v154
  %174 = vmatprep.subr.mxu0 0.0
  %175 = vmatpush1.msra.mxu0 0.0
  %176 = vmatprep.subr.mxu0 0.0
  %177 = vmatpush1.msra.mxu0 0.0
  %178 = vmatprep.subr.mxu0 0.0
  %179 = vmatpush1.msra.mxu0 0.0
  %180 = vmatprep.subr.mxu0 0.0
  %181 = vmatpush1.msra.mxu0 0.0
  %182 = vmatprep.subr.mxu0 0.0
  %183 = vmatpush1.msra.mxu0 0.0
  %184 = vmatprep.subr.mxu0 0.0
  %185 = vmatpush1.msra.mxu0 0.0
  %186 = vmatprep.subr.mxu0 0.0
  %187 = vmatpush1.msra.mxu0 0.0
  %188 = vmatprep.subr.mxu0 0.0
  %189 = vmatpush1.msra.mxu0 0.0
  %190 = vmatprep.subr.mxu0 0.0
  %191 = vmatpush1.msra.mxu0 0.0
  %192 = vmatprep.subr.mxu0 0.0
  %193 = vmatpush1.msra.mxu0 0.0
  %194 = vmatprep.subr.mxu0 0.0
  %195 = vmatpush1.msra.mxu0 0.0
  %196 = vmatprep.subr.mxu0 0.0
  %197 = vmatpush1.msra.mxu0 0.0
  %198 = vmatprep.subr.mxu0 0.0
  %199 = vmatpush1.msra.mxu0 0.0
  %200 = vmatprep.subr.mxu0 0.0
  %201 = vmatpush1.msra.mxu0 0.0
  %202 = vmatprep.subr.mxu0 0.0
  %203 = vmatpush1.msra.mxu0 0.0
  %204 = vmatprep.subr.mxu0 0.0
  %205 = vmatpush1.msra.mxu0 0.0
  %206 = vmatprep.subr.mxu0 0.0
  %207 = vmatpush1.msra.mxu0 0.0
  %208 = vmatprep.subr.mxu0 0.0
  %209 = vmatpush1.msra.mxu0 0.0
  %210 = vmatprep.subr.mxu0 0.0
  %211 = vmatpush1.msra.mxu0 0.0
  %212 = vmatprep.subr.mxu0 0.0
  %213 = vmatpush1.msra.mxu0 0.0
  %214 = vmatprep.subr.mxu0 0.0
  %215 = vmatpush1.msra.mxu0 0.0
  %216 = vmatprep.subr.mxu0 0.0
  %217 = vmatpush1.msra.mxu0 0.0
  %218 = vmatprep.subr.mxu0 0.0
  %219 = vmatpush1.msra.mxu0 0.0
  %220 = vmatprep.subr.mxu0 0.0
  %221 = vmatpush1.msra.mxu0 0.0
  %222 = vmatprep.subr.mxu0 0.0
  %223 = vmatpush1.msra.mxu0 0.0
  %224 = vmatprep.subr.mxu0 0.0
  %225 = vmatpush1.msra.mxu0 0.0
  %226 = vmatprep.subr.mxu0 0.0
  %227 = vmatpush1.msra.mxu0 0.0
  %228 = vmatprep.subr.mxu0 0.0
  %229 = vmatpush1.msra.mxu0 0.0
  %230 = vmatprep.mubr.f32.mxu0 0.0
  %231 = vmatmul.mubr.f32.gmra.mrb[0].mxu0 %v164
  %v232 = vpop.f32.mrb[0].mxu0
  %v233 = vadd.f32 %v160, %v232
  %v234 = vpop.f32.mrb[0].mxu0
  %235 = vdwg.mxu0
  %v237 = vrot.slane %v233, 1
  %v239 = vsub.f32 %v233, %v237
  %v240 = vmul.f32 %v239, 1.442695
  %v241 = vpow.pop %v240
  %v242 = vadd.f32 %v241, 1.0
  %v243 = vrcp.pop %v242
  %v244 = vmul.f32 1.0, %v243
  %v245 = vsub.f32 1.0, %v244
  %vm246 = vcmask 8192
  %247 = vst.msk [vmem:[%s5] sm:$0x1] %vm246, %v245
  %248 = vst.msk [vmem:[%s5 + $0x1] sm:$0x1] %vm246, %v244
  // Predicated region
  $region22: #{_policy_forward_impl.1} parent=0 // pred_check
    _
  $region23: #{_policy_forward_impl.1} parent=0 // pred_check_branch
    %250 = sbr.rel (0) target = $region25
  $region24: #{_policy_forward_impl.1} parent=0 // pred_region
    _
  $region25: #{_policy_forward_impl.1} parent=0 // pred_fallthru
    _
  // Predicated region
  $region26: #{_policy_forward_impl.1} parent=0 // pred_check
    _
  $region27: #{_policy_forward_impl.1} parent=0 // pred_check_branch
    %252 = sbr.rel (0) target = $region29
  $region28: #{_policy_forward_impl.1} parent=0 // pred_region
    _
  $region29: #{_policy_forward_impl.1} parent=0 // pred_fallthru
    _

</llo_original>
